<compile_context>
chip_gen: v7x
topology: tpu7x:2x2x1
jax: 0.10.0
libtpu: 0.0.40
codegen_flags: <defaults>
</compile_context>

<pallas_src>
import jax
import jax.numpy as jnp
from jax.experimental import pallas as pl
from jax.experimental.pallas import tpu as pltpu


def _copy_kernel(x_ref, o_ref):
    # Plain lane-dense 2-D copy of one (block_r, C) tile.
    o_ref[...] = x_ref[...]


def _pick_slab(total, n, flat):
    """Choose a lane/sublane-dense (R, C) with R*C == total.

    Prefers C a large multiple of 128 while keeping R >= 8 so full vregs are
    used even for tiny batch sizes.  Falls back to the logical (n, flat) slab
    when the total element count has no factor of 128.
    """
    best_c = None
    for c in (16384, 8192, 4096, 2048, 1024, 512, 256, 128):
        if total % c == 0:
            if best_c is None:
                best_c = c            # largest 128-multiple divisor
            if total // c >= 8:
                return total // c, c  # largest such divisor with >=8 sublanes
    if best_c is not None:
        return total // best_c, best_c
    return n, flat                    # no dense repack possible


def flatten(x, *, donate=False):
    """Pallas equivalent of Flatten.forward: (N, ...) -> (N, prod(rest))."""
    n = x.shape[0]
    flat = 1
    for d in x.shape[1:]:
        flat *= d
    total = n * flat

    itemsize = jnp.dtype(x.dtype).itemsize
    total_bytes = total * itemsize

    # ---- generation-aware VMEM budgets -------------------------------------
    try:
        vmem_cap = int(getattr(pltpu.get_tpu_info(),
                               "vmem_capacity_bytes", 64 << 20))
    except Exception:  # pragma: no cover - conservative fallback
        vmem_cap = 64 << 20
    # in + out, each double-buffered => 4 live buffers; keep them <= ~vmem/2.
    block_budget = min(8 << 20, max(1 << 20, vmem_cap // 8))
    vmem_limit = int(min(vmem_cap * 3 // 4, 100 << 20))

    # ---- dense slab & tiling ------------------------------------------------
    R, C = _pick_slab(total, n, flat)
    slab = jnp.reshape(x, (R, C))     # free metadata reshape in the wrapper

    row_bytes = C * itemsize
    if R * row_bytes <= block_budget:
        # Whole slab fits in one pipelined block.
        if total_bytes >= (4 << 20) and R >= 16:
            # Split in two so a 2-TC chip (v7x) shards the copy.
            block_r = max(8, ((R // 2 + 7) // 8) * 8)
        else:
            block_r = R               # single full-extent block (always legal)
    else:
        rows_budget = max(1, block_budget // row_bytes)
        block_r = min(max(8, (rows_budget // 8) * 8), R)

    grid_r = pl.cdiv(R, block_r)

    out_slab = pl.pallas_call(
        _copy_kernel,
        out_shape=jax.ShapeDtypeStruct((R, C), x.dtype),
        grid=(grid_r,),
        in_specs=[pl.BlockSpec((block_r, C), lambda i: (i, 0))],
        out_specs=pl.BlockSpec((block_r, C), lambda i: (i, 0)),
        compiler_params=pltpu.CompilerParams(
            dimension_semantics=("parallel",),
            vmem_limit_bytes=vmem_limit),
        cost_estimate=pl.CostEstimate(
            flops=0, transcendentals=0, bytes_accessed=2 * total_bytes),
        input_output_aliases=({0: 0} if donate else {}),
    )(slab)

    # Free metadata reshape back to the logical flattened view.
    return jnp.reshape(out_slab, (n, flat))


if __name__ == "__main__":
    key = jax.random.PRNGKey(0)
    x = jax.random.normal(key, (2, 4, 16, 16), dtype=jnp.float32)

    out = flatten(x)
    out = jax.block_until_ready(out)

    # Reference: plain row-major reshape (same semantics as torch .view).
    ref = jnp.reshape(x, (x.shape[0], -1))
    assert out.shape == (2, 4 * 16 * 16), out.shape
    assert out.dtype == x.dtype
    assert bool(jnp.array_equal(out, ref))

    print("KERNEL_OK")
</pallas_src>

<mosaic_0001>
module attributes {stable_mosaic.version = 11 : i64} {
  func.func @_copy_kernel(%arg0: i32, %arg1: memref<8x256xf32, #tpu.memory_space<vmem>>, %arg2: memref<8x256xf32, #tpu.memory_space<vmem>>) attributes {dimension_semantics = [#tpu.dimension_semantics<parallel>], iteration_bounds = array<i64: 1>, scalar_prefetch = 0 : i64, scratch_operands = 0 : i64, tpu.core_type = #tpu.core_type<tc>, window_params = [{transform_indices = @transform_0, window_bounds = array<i64: 8, 256>}, {transform_indices = @transform_1, window_bounds = array<i64: 8, 256>}]} {
    %c0 = arith.constant 0 : index
    %c0_0 = arith.constant 0 : index
    %0 = vector.load %arg1[%c0, %c0_0] : memref<8x256xf32, #tpu.memory_space<vmem>>, vector<8x256xf32>
    %c0_1 = arith.constant 0 : index
    %c0_2 = arith.constant 0 : index
    %1 = vector.load %arg2[%c0_1, %c0_2] : memref<8x256xf32, #tpu.memory_space<vmem>>, vector<8x256xf32>
    tpu.vector_store %arg2[%c0_1, %c0_2], %0 {strides = array<i32>} : memref<8x256xf32, #tpu.memory_space<vmem>>, vector<8x256xf32>,
    return
  }
  func.func @transform_0(%arg0: i32) -> (i32, i32) {
    %c0_i32 = arith.constant 0 : i32
    %c0_i32_0 = arith.constant 0 : i32
    return %arg0, %c0_i32 : i32, i32
  }
  func.func @transform_1(%arg0: i32) -> (i32, i32) {
    %c0_i32 = arith.constant 0 : i32
    %c0_i32_0 = arith.constant 0 : i32
    return %arg0, %c0_i32 : i32, i32
  }
}

</mosaic_0001>

<llo_original>
// kernel: tpu_custom_call.1
$region0: #{tpu_custom_call.1}
  #allocation0 [shape = 'u32[]', space=smem, size = 0x4, offset = 0x4, fixed_abs, tag = 'smem constant byte address 0x4 - core index']
  #allocation1 [shape = 'u32[144,128]{1,0:T(1,128)}', space=vmem, size = 0x12000, scoped, tag = 'internal scratch']
  %s0 = inlined_call_operand.hbm [shape: f32[8,256], index: 0, kind: input, shape index: {}]
  %s1 = inlined_call_operand.hbm [shape: f32[8,256], index: 1, kind: output, shape index: {}]
  %s2 = sld [smem:[#allocation0]]
  $region18: #{tpu_custom_call.1} parent=0
    _
  %s4 = ssub.s32 1, %s2
  %s5 = scalar_select 0, %s4, %s2
  $region1: #{tpu_custom_call.1} parent=0
    #allocation2 [shape = 'u8[8192]{0}', space=vmem, size = 0x2000, scoped, tag = 'input window, operand 0, single buffered']
    #allocation3 [shape = 's32[1]{0}', space=sflag, size = 0x4, scoped, tag = 'scoped memory for tpu_custom_call.1']
    #allocation4 [shape = 's32[1]{0}', space=sflag, size = 0x4, scoped, tag = 'scoped memory for tpu_custom_call.1']
    #allocation5 [shape = 'u8[8192]{0}', space=vmem, size = 0x2000, scoped, tag = 'output window, operand 0, single buffered']
    %6 = vsyncpa [#allocation3], 0
    %7 = vsyncpa [#allocation4], 0
    // Predicated region
    $region2: #{tpu_custom_call.1} parent=1 // pred_check
      _
    $region3: #{tpu_custom_call.1} parent=1 // pred_check_branch
      %9 = sbr.rel (0) target = $region5
    $region4: #{tpu_custom_call.1} parent=1 // pred_region
      %s11 = ssub.s32 256, 256
      %12 = vsyncadd [#allocation3], %s11
      %s14 = sshll.u32 [#allocation2], 4
      %s15 = int_to_ptr.vmem [resolvable:$true] %s14
      %17 = dma.hbm_to_vmem [thread:$0]  %s0, 256, %s15, [#allocation3]
    $region5: #{tpu_custom_call.1} parent=1 // pred_fallthru
      _
    // Predicated region
    $region6: #{tpu_custom_call.1} parent=1 // pred_check
      _
    $region7: #{tpu_custom_call.1} parent=1 // pred_check_branch
      %19 = sbr.rel (0) target = $region9
    $region8: #{tpu_custom_call.1} parent=1 // pred_region
      %20 = dma.done [#allocation3], 256
    $region9: #{tpu_custom_call.1} parent=1 // pred_fallthru
      _
    %v21 = vld [vmem:[#allocation2] sm:$0xff]
    %v22 = vld [vmem:[#allocation2 + $0x8] sm:$0xff]
    %23 = vst [vmem:[#allocation5] sm:$0xff] %v21
    %24 = vst [vmem:[#allocation5 + $0x8] sm:$0xff] %v22
    // Predicated region
    $region10: #{tpu_custom_call.1} parent=1 // pred_check
      _
    $region11: #{tpu_custom_call.1} parent=1 // pred_check_branch
      %26 = sbr.rel (0) target = $region13
    $region12: #{tpu_custom_call.1} parent=1 // pred_region
      %s28 = ssub.s32 256, 256
      %29 = vsyncadd [#allocation4], %s28
      %s31 = sshll.u32 [#allocation5], 4
      %s32 = int_to_ptr.vmem [resolvable:$true] %s31
      %34 = dma.vmem_to_hbm [thread:$0]  %s32, 256, %s1, [#allocation4]
    $region13: #{tpu_custom_call.1} parent=1 // pred_fallthru
      _
    // Predicated region
    $region14: #{tpu_custom_call.1} parent=1 // pred_check
      _
    $region15: #{tpu_custom_call.1} parent=1 // pred_check_branch
      %36 = sbr.rel (0) target = $region17
    $region16: #{tpu_custom_call.1} parent=1 // pred_region
      %37 = dma.done [#allocation4], 256
    $region17: #{tpu_custom_call.1} parent=1 // pred_fallthru
      _
    %38 = vsyncpa [#allocation3], 1
    %39 = vsyncpa [#allocation4], 1

</llo_original>
